<compile_context>
chip_gen: v7x
topology: tpu7x:2x2x1
jax: 0.10.0
libtpu: 0.0.40
codegen_flags: <defaults>
</compile_context>

<pallas_src>
import functools

import jax
import jax.numpy as jnp
from jax.experimental import pallas as pl
from jax.experimental.pallas import tpu as pltpu


def _loss_kernel(method, n_walkers,
                 flag_ref,       # SMEM (1,)  int32: 1 -> reweight by (psi/psi0)^2
                 pos_t_ref,      # VMEM (D, N) f32   walkers on lanes
                 w1t_ref,        # VMEM (H, D) f32
                 b1_ref,         # VMEM (H, 1) f32
                 w2t_ref,        # VMEM (2, H) f32   row 0 = psi head, row 1 = eloc head
                 psi0_ref,       # VMEM (1, N) f32
                 out_ref,        # VMEM (3, N) f32   row 0 psi, row 1 eloc, row 2 loss (bcast)
                 w_scr):         # VMEM (1, N) f32   scratch: sampling weights
    # --- synthetic wave function, walker axis on lanes ---
    h = jnp.tanh(
        jnp.dot(w1t_ref[...], pos_t_ref[...], preferred_element_type=jnp.float32)
        + b1_ref[...]                                       # (H,1) broadcast over lanes
    )                                                       # [H, N]
    # fused psi/eloc heads: ONE MXU matmul instead of two degenerate [N,H]x[H,1]
    pe = jnp.dot(w2t_ref[...], h, preferred_element_type=jnp.float32)   # [2, N]
    psi = pe[0:1, :]                                        # [1, N]
    eloc = pe[1:2, :]                                        # [1, N]

    # --- sampling weights: uniform on first call, (psi/psi0)^2 normalized after ---
    w_scr[...] = jnp.ones_like(w_scr)

    @pl.when(flag_ref[0] > 0)
    def _():
        # exact divides keep the 1e-4 check tight; pl.reciprocal(approx=True)
        # could move the normalization onto the EUP if tolerance is relaxed.
        r = (psi / psi0_ref[...]) ** 2                      # [1, N]
        w_scr[...] = r / jnp.sum(r)

    # --- loss = loss_fn(weight * local_energies)  (clip=False -> full mask) ---
    weighted = w_scr[...] * eloc                            # [1, N] lane-dense
    inv_n = 1.0 / float(n_walkers)
    mean = jnp.sum(weighted) * inv_n
    if method == 'variance':
        loss = jnp.sum((weighted - mean) ** 2) * (1.0 / float(n_walkers - 1))
    else:  # 'energy'
        loss = mean

    # packed lane-dense output: single slab, no standalone (1,1) scalar output
    out_ref[0:2, :] = pe
    out_ref[2:3, :] = jnp.broadcast_to(loss, (1, n_walkers)).astype(jnp.float32)


def build_loss_call(N, D, H, method='variance'):
    kernel = functools.partial(_loss_kernel, method, N)
    vmem = pltpu.MemorySpace.VMEM
    return pl.pallas_call(
        kernel,
        out_shape=jax.ShapeDtypeStruct((3, N), jnp.float32),   # psi / eloc / loss packed
        in_specs=[
            pl.BlockSpec(memory_space=pltpu.MemorySpace.SMEM),  # flag
            pl.BlockSpec(memory_space=vmem),                    # pos^T   (D, N)
            pl.BlockSpec(memory_space=vmem),                    # W1^T    (H, D)
            pl.BlockSpec(memory_space=vmem),                    # b1      (H, 1)
            pl.BlockSpec(memory_space=vmem),                    # fused heads (2, H)
            pl.BlockSpec(memory_space=vmem),                    # psi0    (1, N)
        ],
        out_specs=pl.BlockSpec(memory_space=vmem),
        scratch_shapes=[pltpu.VMEM((1, N), jnp.float32)],       # sampling weights
    )


def loss_forward(loss_call, pos, W1, b1, w_psi, w_eloc, psi0, flag):
    """Wrapper mirroring Loss.forward: layout plumbing only (transposes/reshapes)."""
    N, _ = pos.shape
    H = W1.shape[1]
    pos_t = pos.T                                            # [D, N]
    w1_t = W1.T                                              # [H, D]
    b1_col = b1.reshape(H, 1)                                # [H, 1]
    w2_t = jnp.concatenate([w_psi, w_eloc], axis=1).T        # [2, H]
    psi0_row = psi0.reshape(1, N)                            # [1, N]
    out = loss_call(flag, pos_t, w1_t, b1_col, w2_t, psi0_row)
    loss = out[2, 0]
    psi = out[0].reshape(N, 1)                               # torch-style column
    eloc = out[1].reshape(N, 1)
    return loss, eloc, psi


def _reference(pos, W1, b1, wpsi, weloc, psi0, use_ratio, method='variance'):
    """Pure-JAX reference mirroring Loss.forward semantics."""
    h = jnp.tanh(pos @ W1 + b1)
    psi = h @ wpsi
    eloc = h @ weloc
    if use_ratio:
        w = (psi / psi0) ** 2
        w = w / jnp.sum(w)
    else:
        w = jnp.ones_like(psi)
    weighted = (w * eloc).reshape(-1)
    if method == 'variance':
        loss = jnp.var(weighted, ddof=1)    # torch.var default is unbiased
    else:
        loss = jnp.mean(weighted)
    return loss, eloc, psi


if __name__ == "__main__":
    N, D, H = 16, 12, 32   # 16 walkers, 4 electrons x 3 dims, 32 hidden units

    key = jax.random.PRNGKey(0)
    k1, k2, k3, k4, k5, k6 = jax.random.split(key, 6)
    pos = jax.random.normal(k1, (N, D), jnp.float32)
    W1 = 0.1 * jax.random.normal(k2, (D, H), jnp.float32)
    b1 = 0.1 * jax.random.normal(k3, (1, H), jnp.float32)
    w_psi = 0.1 * jax.random.normal(k4, (H, 1), jnp.float32)
    w_eloc = 0.1 * jax.random.normal(k5, (H, 1), jnp.float32)

    loss_call = build_loss_call(N, D, H, method='variance')

    # --- first call: weight['psi0'] is None -> uniform weights ---
    flag0 = jnp.zeros((1,), jnp.int32)
    psi0_dummy = jnp.ones((N, 1), jnp.float32)
    loss1, eloc1, psi1 = loss_forward(loss_call, pos, W1, b1, w_psi, w_eloc,
                                      psi0_dummy, flag0)

    # --- second call: reweight with (psi / psi0)^2 normalized ---
    pos2 = pos + 0.05 * jax.random.normal(k6, (N, D), jnp.float32)
    flag1 = jnp.ones((1,), jnp.int32)
    loss2, eloc2, psi2 = loss_forward(loss_call, pos2, W1, b1, w_psi, w_eloc,
                                      psi1, flag1)

    jax.block_until_ready((loss1, eloc1, psi1, loss2, eloc2, psi2))

    # silent correctness check against a pure-JAX reference
    rl1, re1, _ = _reference(pos, W1, b1, w_psi, w_eloc, psi0_dummy, False)
    rl2, re2, _ = _reference(pos2, W1, b1, w_psi, w_eloc, psi1, True)
    assert jnp.allclose(loss1, rl1, rtol=2e-4, atol=1e-5)
    assert jnp.allclose(loss2, rl2, rtol=2e-4, atol=1e-5)
    assert jnp.allclose(eloc1, re1, rtol=2e-4, atol=1e-5)
    assert jnp.allclose(eloc2, re2, rtol=2e-4, atol=1e-5)

    print("KERNEL_OK")
</pallas_src>

<mosaic_0001>
module attributes {stable_mosaic.version = 11 : i64} {
  func.func @_loss_kernel(%arg0: memref<1xi32, #tpu.memory_space<smem>>, %arg1: memref<12x16xf32, #tpu.memory_space<vmem>>, %arg2: memref<32x12xf32, #tpu.memory_space<vmem>>, %arg3: memref<32x1xf32, #tpu.memory_space<vmem>>, %arg4: memref<2x32xf32, #tpu.memory_space<vmem>>, %arg5: memref<1x16xf32, #tpu.memory_space<vmem>>, %arg6: memref<3x16xf32, #tpu.memory_space<vmem>>, %arg7: memref<1x16xf32, #tpu.memory_space<vmem>>) attributes {dimension_semantics = [], scalar_prefetch = 0 : i64, scratch_operands = 1 : i64, tpu.core_type = #tpu.core_type<tc>} {
    %c0 = arith.constant 0 : index
    %c0_0 = arith.constant 0 : index
    %0 = vector.load %arg2[%c0, %c0_0] : memref<32x12xf32, #tpu.memory_space<vmem>>, vector<32x12xf32>
    %c0_1 = arith.constant 0 : index
    %c0_2 = arith.constant 0 : index
    %1 = vector.load %arg1[%c0_1, %c0_2] : memref<12x16xf32, #tpu.memory_space<vmem>>, vector<12x16xf32>
    %cst = arith.constant dense<0.000000e+00> : vector<32x16xf32>
    %2 = tpu.matmul %0, %1, %cst {dimension_numbers = #tpu.dot_dimension_numbers<[1], [0], [0], [1], [0, 0, 1, 1], [], []>} : vector<32x12xf32>, vector<12x16xf32>, vector<32x16xf32> -> vector<32x16xf32>
    %c0_3 = arith.constant 0 : index
    %c0_4 = arith.constant 0 : index
    %3 = vector.load %arg3[%c0_3, %c0_4] : memref<32x1xf32, #tpu.memory_space<vmem>>, vector<32x1xf32>
    %4 = vector.broadcast %3 : vector<32x1xf32> to vector<32x16xf32>
    %5 = arith.addf %2, %4 : vector<32x16xf32>
    %6 = math.tanh %5 : vector<32x16xf32>
    %c0_5 = arith.constant 0 : index
    %c0_6 = arith.constant 0 : index
    %7 = vector.load %arg4[%c0_5, %c0_6] : memref<2x32xf32, #tpu.memory_space<vmem>>, vector<2x32xf32>
    %cst_7 = arith.constant dense<0.000000e+00> : vector<2x16xf32>
    %8 = tpu.matmul %7, %6, %cst_7 {dimension_numbers = #tpu.dot_dimension_numbers<[1], [0], [0], [1], [0, 0, 1, 1], [], []>} : vector<2x32xf32>, vector<32x16xf32>, vector<2x16xf32> -> vector<2x16xf32>
    %9 = vector.extract_strided_slice %8 {offsets = [0, 0], sizes = [1, 16], strides = [1, 1]} : vector<2x16xf32> to vector<1x16xf32>
    %10 = vector.extract_strided_slice %8 {offsets = [1, 0], sizes = [1, 16], strides = [1, 1]} : vector<2x16xf32> to vector<1x16xf32>
    %cst_8 = arith.constant 1.000000e+00 : f32
    %11 = vector.broadcast %cst_8 : f32 to vector<1x16xf32>
    %c0_9 = arith.constant 0 : index
    %c0_10 = arith.constant 0 : index
    %12 = vector.load %arg7[%c0_9, %c0_10] : memref<1x16xf32, #tpu.memory_space<vmem>>, vector<1x16xf32>
    tpu.vector_store %arg7[%c0_9, %c0_10], %11 {strides = array<i32>} : memref<1x16xf32, #tpu.memory_space<vmem>>, vector<1x16xf32>,
    %c0_11 = arith.constant 0 : index
    %13 = memref.load %arg0[%c0_11] : memref<1xi32, #tpu.memory_space<smem>>
    %c0_i32 = arith.constant 0 : i32
    %14 = arith.cmpi sgt, %13, %c0_i32 : i32
    %15 = arith.extui %14 : i1 to i32
    %c0_i32_12 = arith.constant 0 : i32
    %16 = arith.cmpi ne, %15, %c0_i32_12 : i32
    scf.if %16 {
      %c0_22 = arith.constant 0 : index
      %c0_23 = arith.constant 0 : index
      %35 = vector.load %arg5[%c0_22, %c0_23] : memref<1x16xf32, #tpu.memory_space<vmem>>, vector<1x16xf32>
      %36 = arith.divf %9, %35 : vector<1x16xf32>
      %37 = arith.mulf %36, %36 : vector<1x16xf32>
      %38 = vector.shape_cast %37 : vector<1x16xf32> to vector<1x1x16xf32>
      %cst_24 = arith.constant dense<0.000000e+00> : vector<1xf32>
      %39 = vector.multi_reduction <add>, %38, %cst_24 [1, 2] : vector<1x1x16xf32> to vector<1xf32>
      %40 = vector.shape_cast %39 : vector<1xf32> to vector<1x1x1xf32>
      %41 = vector.extract %40[0, 0, 0] : f32 from vector<1x1x1xf32>
      %42 = vector.broadcast %41 : f32 to vector<1x16xf32>
      %43 = arith.divf %37, %42 : vector<1x16xf32>
      %c0_25 = arith.constant 0 : index
      %c0_26 = arith.constant 0 : index
      %44 = vector.load %arg7[%c0_25, %c0_26] : memref<1x16xf32, #tpu.memory_space<vmem>>, vector<1x16xf32>
      tpu.vector_store %arg7[%c0_25, %c0_26], %43 {strides = array<i32>} : memref<1x16xf32, #tpu.memory_space<vmem>>, vector<1x16xf32>,
    } else {
    }
    %c0_13 = arith.constant 0 : index
    %c0_14 = arith.constant 0 : index
    %17 = vector.load %arg7[%c0_13, %c0_14] : memref<1x16xf32, #tpu.memory_space<vmem>>, vector<1x16xf32>
    %18 = arith.mulf %17, %10 : vector<1x16xf32>
    %19 = vector.shape_cast %18 : vector<1x16xf32> to vector<1x1x16xf32>
    %cst_15 = arith.constant dense<0.000000e+00> : vector<1xf32>
    %20 = vector.multi_reduction <add>, %19, %cst_15 [1, 2] : vector<1x1x16xf32> to vector<1xf32>
    %21 = vector.shape_cast %20 : vector<1xf32> to vector<1x1x1xf32>
    %22 = vector.extract %21[0, 0, 0] : f32 from vector<1x1x1xf32>
    %cst_16 = arith.constant 6.250000e-02 : f32
    %23 = arith.mulf %22, %cst_16 : f32
    %24 = vector.broadcast %23 : f32 to vector<1x16xf32>
    %25 = arith.subf %18, %24 : vector<1x16xf32>
    %26 = arith.mulf %25, %25 : vector<1x16xf32>
    %27 = vector.shape_cast %26 : vector<1x16xf32> to vector<1x1x16xf32>
    %cst_17 = arith.constant dense<0.000000e+00> : vector<1xf32>
    %28 = vector.multi_reduction <add>, %27, %cst_17 [1, 2] : vector<1x1x16xf32> to vector<1xf32>
    %29 = vector.shape_cast %28 : vector<1xf32> to vector<1x1x1xf32>
    %30 = vector.extract %29[0, 0, 0] : f32 from vector<1x1x1xf32>
    %cst_18 = arith.constant 0.0666666701 : f32
    %31 = arith.mulf %30, %cst_18 : f32
    %c0_19 = arith.constant 0 : index
    %c0_20 = arith.constant 0 : index
    %32 = vector.load %arg6[%c0_19, %c0_20] : memref<3x16xf32, #tpu.memory_space<vmem>>, vector<2x16xf32>
    tpu.vector_store %arg6[%c0_19, %c0_20], %8 {strides = array<i32>} : memref<3x16xf32, #tpu.memory_space<vmem>>, vector<2x16xf32>,
    %33 = vector.broadcast %31 : f32 to vector<1x16xf32>
    %c2 = arith.constant 2 : index
    %c0_21 = arith.constant 0 : index
    %34 = vector.load %arg6[%c2, %c0_21] : memref<3x16xf32, #tpu.memory_space<vmem>>, vector<1x16xf32>
    tpu.vector_store %arg6[%c2, %c0_21], %33 {strides = array<i32>} : memref<3x16xf32, #tpu.memory_space<vmem>>, vector<1x16xf32>,
    return
  }
}

</mosaic_0001>

<llo_original>
// kernel: tpu_custom_call.1
$region0: #{tpu_custom_call.1}
  #allocation0 [shape = 'u32[]', space=smem, size = 0x4, offset = 0x4, fixed_abs, tag = 'smem constant byte address 0x4 - core index']
  #allocation1 [shape = 'u32[144,128]{1,0:T(1,128)}', space=vmem, size = 0x12000, scoped, tag = 'internal scratch']
  #allocation2 [shape = 'f32[1,16]{1,0:T(1,128)}', space=vmem, size = 0x200, scoped, tag = 'scratch operand']
  #allocation3 [shape = 's32[1]{0:T(128)S(6)}', space=smem, size = 0x200, scoped, tag = 'scoped memory for tpu_custom_call.1']
  %s0 = inlined_call_operand.<no memory space> [shape: s32[1], index: 0, kind: input, shape index: {}]
  %s1 = inlined_call_operand.vmem [shape: f32[12,16], index: 1, kind: input, shape index: {}]
  %s2 = inlined_call_operand.vmem [shape: f32[32,12], index: 2, kind: input, shape index: {}]
  %s3 = inlined_call_operand.vmem [shape: f32[32,1], index: 3, kind: input, shape index: {}]
  %s4 = inlined_call_operand.vmem [shape: f32[2,32], index: 4, kind: input, shape index: {}]
  %s5 = inlined_call_operand.vmem [shape: f32[1,16], index: 5, kind: input, shape index: {}]
  %s6 = inlined_call_operand.hbm [shape: f32[3,16], index: 6, kind: output, shape index: {}]
  %s7 = sld [smem:[#allocation0]]
  $region38: #{tpu_custom_call.1} parent=0
    _
  %s9 = ssub.s32 1, %s7
  %s10 = scalar_select 0, %s9, %s7
  %11 = sst [smem:[#allocation3]] %s0
  $region1: #{tpu_custom_call.1} parent=0
    #allocation4 [shape = 'u8[2048]{0}', space=vmem, size = 0x800, scoped, tag = 'output window, operand 0, single buffered']
    #allocation5 [shape = 's32[1]{0}', space=sflag, size = 0x4, scoped, tag = 'scoped memory for tpu_custom_call.1']
    %12 = vsyncpa [#allocation5], 0
    // Predicated region
    $region2: #{tpu_custom_call.1} parent=1 // pred_check
      _
    $region3: #{tpu_custom_call.1} parent=1 // pred_check_branch
      %14 = sbr.rel (0) target = $region5
    $region4: #{tpu_custom_call.1} parent=1 // pred_region
      _
    $region5: #{tpu_custom_call.1} parent=1 // pred_fallthru
      _
    // Predicated region
    $region6: #{tpu_custom_call.1} parent=1 // pred_check
      _
    $region7: #{tpu_custom_call.1} parent=1 // pred_check_branch
      %16 = sbr.rel (0) target = $region9
    $region8: #{tpu_custom_call.1} parent=1 // pred_region
      _
    $region9: #{tpu_custom_call.1} parent=1 // pred_fallthru
      _
    // Predicated region
    $region10: #{tpu_custom_call.1} parent=1 // pred_check
      _
    $region11: #{tpu_custom_call.1} parent=1 // pred_check_branch
      %18 = sbr.rel (0) target = $region13
    $region12: #{tpu_custom_call.1} parent=1 // pred_region
      _
    $region13: #{tpu_custom_call.1} parent=1 // pred_fallthru
      _
    // Predicated region
    $region14: #{tpu_custom_call.1} parent=1 // pred_check
      _
    $region15: #{tpu_custom_call.1} parent=1 // pred_check_branch
      %20 = sbr.rel (0) target = $region17
    $region16: #{tpu_custom_call.1} parent=1 // pred_region
      _
    $region17: #{tpu_custom_call.1} parent=1 // pred_fallthru
      _
    // Predicated region
    $region18: #{tpu_custom_call.1} parent=1 // pred_check
      _
    $region19: #{tpu_custom_call.1} parent=1 // pred_check_branch
      %22 = sbr.rel (0) target = $region21
    $region20: #{tpu_custom_call.1} parent=1 // pred_region
      _
    $region21: #{tpu_custom_call.1} parent=1 // pred_fallthru
      _
    // Predicated region
    $region22: #{tpu_custom_call.1} parent=1 // pred_check
      _
    $region23: #{tpu_custom_call.1} parent=1 // pred_check_branch
      %24 = sbr.rel (0) target = $region25
    $region24: #{tpu_custom_call.1} parent=1 // pred_region
      _
    $region25: #{tpu_custom_call.1} parent=1 // pred_fallthru
      _
    %v25 = vld [vmem:[%s2] sm:$0xff]
    %v26 = vld [vmem:[%s2 + $0x8] sm:$0xff]
    %v27 = vld [vmem:[%s2 + $0x10] sm:$0xff]
    %v28 = vld [vmem:[%s2 + $0x18] sm:$0xff]
    %v29 = vld [vmem:[%s1] sm:$0xff]
    %v30 = vld [vmem:[%s1 + $0x8] sm:$0xf]
    %v31 = vld [vmem:[%s3] sm:$0xff]
    %v32 = vld [vmem:[%s3 + $0x8] sm:$0xff]
    %v33 = vld [vmem:[%s3 + $0x10] sm:$0xff]
    %v34 = vld [vmem:[%s3 + $0x18] sm:$0xff]
    %36 = vset.pattern.permute.xlu0 0
    %37 = vperm.xlu0 %36, %v31
    %v38 = vpop.permute.xlu0 %37
    %41 = vset.pattern.permute.xlu0 0
    %42 = vperm.xlu0 %41, %v32
    %v43 = vpop.permute.xlu0 %42
    %46 = vset.pattern.permute.xlu0 0
    %47 = vperm.xlu0 %46, %v33
    %v48 = vpop.permute.xlu0 %47
    %51 = vset.pattern.permute.xlu0 0
    %52 = vperm.xlu0 %51, %v34
    %v53 = vpop.permute.xlu0 %52
    %vm55 = vcmask 97280
    %v57 = vsel %vm55, %v25, 0
    %v60 = vsel %vm55, %v26, 0
    %v63 = vsel %vm55, %v27, 0
    %v66 = vsel %vm55, %v28, 0
    %vm68 = vcmask 1043456
    %v70 = vsel %vm68, %v30, 0
    %72 = vmatprep.subr.mxu0 0.0
    %73 = vmatpush1.msra.mxu0 %v29
    %74 = vmatprep.subr.mxu0 0.0
    %75 = vmatpush1.msra.mxu0 %v70
    %76 = vmatprep.subr.mxu0 0.0
    %77 = vmatpush1.msra.mxu0 0.0
    %78 = vmatprep.subr.mxu0 0.0
    %79 = vmatpush1.msra.mxu0 0.0
    %80 = vmatprep.subr.mxu0 0.0
    %81 = vmatpush1.msra.mxu0 0.0
    %82 = vmatprep.subr.mxu0 0.0
    %83 = vmatpush1.msra.mxu0 0.0
    %84 = vmatprep.subr.mxu0 0.0
    %85 = vmatpush1.msra.mxu0 0.0
    %86 = vmatprep.subr.mxu0 0.0
    %87 = vmatpush1.msra.mxu0 0.0
    %88 = vmatprep.subr.mxu0 0.0
    %89 = vmatpush1.msra.mxu0 0.0
    %90 = vmatprep.subr.mxu0 0.0
    %91 = vmatpush1.msra.mxu0 0.0
    %92 = vmatprep.subr.mxu0 0.0
    %93 = vmatpush1.msra.mxu0 0.0
    %94 = vmatprep.subr.mxu0 0.0
    %95 = vmatpush1.msra.mxu0 0.0
    %96 = vmatprep.subr.mxu0 0.0
    %97 = vmatpush1.msra.mxu0 0.0
    %98 = vmatprep.subr.mxu0 0.0
    %99 = vmatpush1.msra.mxu0 0.0
    %100 = vmatprep.subr.mxu0 0.0
    %101 = vmatpush1.msra.mxu0 0.0
    %102 = vmatprep.subr.mxu0 0.0
    %103 = vmatpush1.msra.mxu0 0.0
    %104 = vmatprep.subr.mxu0 0.0
    %105 = vmatpush1.msra.mxu0 0.0
    %106 = vmatprep.subr.mxu0 0.0
    %107 = vmatpush1.msra.mxu0 0.0
    %108 = vmatprep.subr.mxu0 0.0
    %109 = vmatpush1.msra.mxu0 0.0
    %110 = vmatprep.subr.mxu0 0.0
    %111 = vmatpush1.msra.mxu0 0.0
    %112 = vmatprep.subr.mxu0 0.0
    %113 = vmatpush1.msra.mxu0 0.0
    %114 = vmatprep.subr.mxu0 0.0
    %115 = vmatpush1.msra.mxu0 0.0
    %116 = vmatprep.subr.mxu0 0.0
    %117 = vmatpush1.msra.mxu0 0.0
    %118 = vmatprep.subr.mxu0 0.0
    %119 = vmatpush1.msra.mxu0 0.0
    %120 = vmatprep.subr.mxu0 0.0
    %121 = vmatpush1.msra.mxu0 0.0
    %122 = vmatprep.subr.mxu0 0.0
    %123 = vmatpush1.msra.mxu0 0.0
    %124 = vmatprep.subr.mxu0 0.0
    %125 = vmatpush1.msra.mxu0 0.0
    %126 = vmatprep.subr.mxu0 0.0
    %127 = vmatpush1.msra.mxu0 0.0
    %128 = vmatprep.subr.mxu0 0.0
    %129 = vmatpush1.msra.mxu0 0.0
    %130 = vmatprep.subr.mxu0 0.0
    %131 = vmatpush1.msra.mxu0 0.0
    %132 = vmatprep.subr.mxu0 0.0
    %133 = vmatpush1.msra.mxu0 0.0
    %134 = vmatprep.subr.mxu0 0.0
    %135 = vmatpush1.msra.mxu0 0.0
    %136 = vmatprep.mubr.f32.mxu0 0.0
    %137 = vmatmul.mubr.f32.gmra.mrb[0].mxu0 %v57
    %v138 = vpop.f32.mrb[0].mxu0
    %v139 = vadd.f32 %v38, %v138
    %v140 = vpop.f32.mrb[0].mxu0
    %141 = vmatprep.mubr.f32.mxu0 0.0
    %142 = vmatmul.mubr.f32.gmra.mrb[0].mxu0 %v60
    %v143 = vpop.f32.mrb[0].mxu0
    %v144 = vadd.f32 %v43, %v143
    %v145 = vpop.f32.mrb[0].mxu0
    %146 = vmatprep.mubr.f32.mxu0 0.0
    %147 = vmatmul.mubr.f32.gmra.mrb[0].mxu0 %v63
    %v148 = vpop.f32.mrb[0].mxu0
    %v149 = vadd.f32 %v48, %v148
    %v150 = vpop.f32.mrb[0].mxu0
    %151 = vmatprep.mubr.f32.mxu0 0.0
    %152 = vmatmul.mubr.f32.gmra.mrb[0].mxu0 %v66
    %v153 = vpop.f32.mrb[0].mxu0
    %v154 = vadd.f32 %v53, %v153
    %v155 = vpop.f32.mrb[0].mxu0
    %156 = vdwg.mxu0
    %v157 = vtanh.pop %v139
    %v158 = vtanh.pop %v144
    %v159 = vtanh.pop %v149
    %v160 = vtanh.pop %v154
    %v161 = vld [vmem:[%s4] sm:$0x3]
    %vm162 = vcmask 261120
    %v164 = vsel %vm162, %v161, 0
    %166 = vmatprep.subr.mxu0 0.0
    %167 = vmatpush1.msra.mxu0 %v157
    %168 = vmatprep.subr.mxu0 0.0
    %169 = vmatpush1.msra.mxu0 %v158
    %170 = vmatprep.subr.mxu0 0.0
    %171 = vmatpush1.msra.mxu0 %v159
    %172 = vmatprep.subr.mxu0 0.0
    %173 = vmatpush1.msra.mxu0 %v160
    %174 = vmatprep.subr.mxu0 0.0
    %175 = vmatpush1.msra.mxu0 0.0
    %176 = vmatprep.subr.mxu0 0.0
    %177 = vmatpush1.msra.mxu0 0.0
    %178 = vmatprep.subr.mxu0 0.0
    %179 = vmatpush1.msra.mxu0 0.0
    %180 = vmatprep.subr.mxu0 0.0
    %181 = vmatpush1.msra.mxu0 0.0
    %182 = vmatprep.subr.mxu0 0.0
    %183 = vmatpush1.msra.mxu0 0.0
    %184 = vmatprep.subr.mxu0 0.0
    %185 = vmatpush1.msra.mxu0 0.0
    %186 = vmatprep.subr.mxu0 0.0
    %187 = vmatpush1.msra.mxu0 0.0
    %188 = vmatprep.subr.mxu0 0.0
    %189 = vmatpush1.msra.mxu0 0.0
    %190 = vmatprep.subr.mxu0 0.0
    %191 = vmatpush1.msra.mxu0 0.0
    %192 = vmatprep.subr.mxu0 0.0
    %193 = vmatpush1.msra.mxu0 0.0
    %194 = vmatprep.subr.mxu0 0.0
    %195 = vmatpush1.msra.mxu0 0.0
    %196 = vmatprep.subr.mxu0 0.0
    %197 = vmatpush1.msra.mxu0 0.0
    %198 = vmatprep.subr.mxu0 0.0
    %199 = vmatpush1.msra.mxu0 0.0
    %200 = vmatprep.subr.mxu0 0.0
    %201 = vmatpush1.msra.mxu0 0.0
    %202 = vmatprep.subr.mxu0 0.0
    %203 = vmatpush1.msra.mxu0 0.0
    %204 = vmatprep.subr.mxu0 0.0
    %205 = vmatpush1.msra.mxu0 0.0
    %206 = vmatprep.subr.mxu0 0.0
    %207 = vmatpush1.msra.mxu0 0.0
    %208 = vmatprep.subr.mxu0 0.0
    %209 = vmatpush1.msra.mxu0 0.0
    %210 = vmatprep.subr.mxu0 0.0
    %211 = vmatpush1.msra.mxu0 0.0
    %212 = vmatprep.subr.mxu0 0.0
    %213 = vmatpush1.msra.mxu0 0.0
    %214 = vmatprep.subr.mxu0 0.0
    %215 = vmatpush1.msra.mxu0 0.0
    %216 = vmatprep.subr.mxu0 0.0
    %217 = vmatpush1.msra.mxu0 0.0
    %218 = vmatprep.subr.mxu0 0.0
    %219 = vmatpush1.msra.mxu0 0.0
    %220 = vmatprep.subr.mxu0 0.0
    %221 = vmatpush1.msra.mxu0 0.0
    %222 = vmatprep.subr.mxu0 0.0
    %223 = vmatpush1.msra.mxu0 0.0
    %224 = vmatprep.subr.mxu0 0.0
    %225 = vmatpush1.msra.mxu0 0.0
    %226 = vmatprep.subr.mxu0 0.0
    %227 = vmatpush1.msra.mxu0 0.0
    %228 = vmatprep.subr.mxu0 0.0
    %229 = vmatpush1.msra.mxu0 0.0
    %230 = vmatprep.mubr.f32.mxu0 0.0
    %231 = vmatmul.mubr.f32.gmra.mrb[0].mxu0 %v164
    %v232 = vpop.f32.mrb[0].mxu0
    %v233 = vadd.f32 0.0, %v232
    %v234 = vpop.f32.mrb[0].mxu0
    %235 = vdwg.mxu0
    %vm236 = vcmask 122880
    %237 = vst.msk [vmem:[#allocation2] sm:$0x1] %vm236, 1.0
    %s238 = sld [smem:[#allocation3]]
    %p239 = scmp.gt.s32.totalorder %s238, 0
    // Predicated region
    $region26: #{tpu_custom_call.1} parent=1 // pred_check
      %p240 = pneg %p239
    $region27: #{tpu_custom_call.1} parent=1 // pred_check_branch
      %242 = sbr.rel (%p240) target = $region29
    $region28: #{tpu_custom_call.1} parent=1 // pred_region
      %v243 = vld [vmem:[%s5] sm:$0x1]
      %v244 = vrcp.pop %v243
      %v245 = vmul.f32 %v233, %v244
      %v246 = vmul.f32 %v245, %v245
      %v247 = vsel %vm236, %v246, 0.0
      %248 = vadd.xlane.f32.xlu0 %v247
      %v249 = vpop.xlane.xlu0 %248
      %v250 = vrot.slane %v249, 4
      %v251 = vadd.f32 %v249, %v250
      %v252 = vrot.slane %v251, 2
      %v253 = vadd.f32 %v251, %v252
      %v254 = vrot.slane %v253, 1
      %v255 = vadd.f32 %v253, %v254
      %s256 = vtos %v255
      %v257 = vstv %s256
      %v258 = vrcp.pop %v257
      %v259 = vmul.f32 %v246, %v258
      %260 = vst.msk [vmem:[#allocation2] sm:$0x1] %vm236, %v259
    $region29: #{tpu_custom_call.1} parent=1 // pred_fallthru
      _
    %v261 = vld [vmem:[#allocation2] sm:$0x1]
    %v264 = vunpack.c.l.s4 1966171168
    %v265 = vunpack.c.0.s8 %v264
    %v266 = vlaneseq
    %v267 = vshrl.u32 %v266, 7
    %v268 = vsub.s32 %v265, %v267
    %v269 = vrot.slane %v233, %v268
    %v270 = vcombine.high %v269, %v269
    %v272 = vunpack.c.l.s4 1966171168
    %v273 = vunpack.c.0.s8 %v272
    %v274 = vlaneseq
    %v275 = vshrl.u32 %v274, 7
    %v276 = vsub.s32 %v273, %v275
    %v277 = vrot.slane %v270, %v276
    %v279 = vmul.f32 %v261, %v277
    %v280 = vsel %vm236, %v279, 0.0
    %281 = vadd.xlane.f32.xlu0 %v280
    %v282 = vpop.xlane.xlu0 %281
    %v283 = vrot.slane %v282, 4
    %v284 = vadd.f32 %v282, %v283
    %v285 = vrot.slane %v284, 2
    %v286 = vadd.f32 %v284, %v285
    %v287 = vrot.slane %v286, 1
    %v288 = vadd.f32 %v286, %v287
    %s289 = vtos %v288
    %s290 = smul.f32 %s289, 0.0625
    %v291 = vstv %s290
    %v292 = vsub.f32 %v279, %v291
    %v293 = vmul.f32 %v292, %v292
    %v294 = vsel %vm236, %v293, 0.0
    %295 = vadd.xlane.f32.xlu0 %v294
    %v296 = vpop.xlane.xlu0 %295
    %v297 = vrot.slane %v296, 4
    %v298 = vadd.f32 %v296, %v297
    %v299 = vrot.slane %v298, 2
    %v300 = vadd.f32 %v298, %v299
    %v301 = vrot.slane %v300, 1
    %v302 = vadd.f32 %v300, %v301
    %s303 = vtos %v302
    %s304 = smul.f32 %s303, 0.06666667
    %vm305 = vcmask 123904
    %306 = vst.msk [vmem:[#allocation4] sm:$0x3] %vm305, %v233
    %v307 = vstv %s304
    %308 = vst.msk [vmem:[#allocation4 + $0x2] sm:$0x1] %vm236, %v307
    // Predicated region
    $region30: #{tpu_custom_call.1} parent=1 // pred_check
      _
    $region31: #{tpu_custom_call.1} parent=1 // pred_check_branch
      %310 = sbr.rel (0) target = $region33
    $region32: #{tpu_custom_call.1} parent=1 // pred_region
      %s312 = ssub.s32 64, 64
      %313 = vsyncadd [#allocation5], %s312
      %s315 = sshll.u32 [#allocation4], 4
      %s316 = int_to_ptr.vmem [resolvable:$true] %s315
      %318 = dma.vmem_to_hbm [thread:$0]  %s316, 64, %s6, [#allocation5]
    $region33: #{tpu_custom_call.1} parent=1 // pred_fallthru
      _
    // Predicated region
    $region34: #{tpu_custom_call.1} parent=1 // pred_check
      _
    $region35: #{tpu_custom_call.1} parent=1 // pred_check_branch
      %320 = sbr.rel (0) target = $region37
    $region36: #{tpu_custom_call.1} parent=1 // pred_region
      %321 = dma.done [#allocation5], 64
    $region37: #{tpu_custom_call.1} parent=1 // pred_fallthru
      _
    %322 = vsyncpa [#allocation5], 1

</llo_original>
